<compile_context>
chip_gen: v5e
topology: v5e:2x2
jax: 0.10.0
libtpu: 0.0.40
codegen_flags: <defaults>
</compile_context>

<pallas_src>
import jax
import jax.numpy as jnp
from jax.experimental import pallas as pl
from jax.experimental.pallas import tpu as pltpu

_LANE = 128          # lane width of a vreg / MXU tile edge
_BF16_SUBLANE = 16   # packed bf16 sublane rows


def _round_up(n, m):
    return ((n + m - 1) // m) * m


def _pad2(a, rows, cols):
    # NOTE: correctness of the lane padding relies on padded WEIGHT ROWS being
    # zero, so the sigmoid(0)=0.5 values living in padded hidden lanes never
    # contribute downstream.  jnp.pad guarantees zeros here; do not replace
    # with an uninitialized buffer.
    return jnp.pad(a, ((0, rows - a.shape[0]), (0, cols - a.shape[1])))


def discriminator_kernel(x_ref, w1_ref, b1_ref, w2_ref, b2_ref, w3_ref, b3_ref,
                         out_ref):
    cdt = w1_ref.dtype  # bf16 compute dtype for the MXU
    # Layer 1: Linear(input -> hidden) + sigmoid (bf16 matmul, f32 epilogue).
    h = jnp.dot(x_ref[...].astype(cdt), w1_ref[...],
                preferred_element_type=jnp.float32)
    h = jax.nn.sigmoid(h + b1_ref[...])
    # Layer 2: Linear(hidden -> hidden) + sigmoid.
    h = jnp.dot(h.astype(cdt), w2_ref[...], preferred_element_type=jnp.float32)
    h = jax.nn.sigmoid(h + b2_ref[...])
    # Layer 3: Linear(hidden -> output) + sigmoid.
    h = jnp.dot(h.astype(cdt), w3_ref[...], preferred_element_type=jnp.float32)
    h = jax.nn.sigmoid(h + b3_ref[...])
    # Transposed store: features on sublanes, batch on lanes -> lane-dense
    # output stream carrying only the real out_size rows.
    out_rows = out_ref.shape[0]
    out_ref[...] = h.T[:out_rows, :].astype(out_ref.dtype)


def _choose_tile_b(B, tile_b):
    tb = min(tile_b, _round_up(B, _BF16_SUBLANE))
    # Keep >= 8 grid steps once batches are big enough that each step still
    # has >= 128 rows, so dimension_semantics=("parallel",) can shard across
    # v7x's 2 TensorCores.  On 1-TC chips (v5e/v6e) this costs ~nothing.
    if B >= 8 * _LANE:
        tb = min(tb, _round_up(pl.cdiv(B, 8), _LANE))
    return tb


def discriminator_forward(x, params, *, tile_b=1024, compute_dtype=jnp.bfloat16):
    """x: [B, input_size] float32. params: dict of (W, b) per layer with W
    stored as [in, out] (already transposed from PyTorch's [out, in]) and b as
    [1, out]. Returns [B, output_size] float32."""
    w1, b1 = params["map1"]
    w2, b2 = params["map2"]
    w3, b3 = params["map3"]

    B, in_size = x.shape
    hid_size = w1.shape[1]
    out_size = w3.shape[1]

    hid_p = _round_up(hid_size, _LANE)
    out_p = _round_up(out_size, _LANE)
    tb = _choose_tile_b(B, tile_b)
    b_p = _round_up(B, tb)
    grid = (b_p // tb,)

    # Input: only the batch dim is (minimally) padded; no feature pad, no cast
    # -> no extra wrapper HBM pass at all when B is already tile-aligned.
    x_in = x if b_p == B else jnp.pad(x, ((0, b_p - B), (0, 0)))

    # Weights: lane-pad feature dims with ZERO rows/cols (see _pad2 note);
    # padded rows are what keep the padded-lane 0.5 activations inert.
    w1_p = _pad2(w1, in_size, hid_p).astype(compute_dtype)
    w2_p = _pad2(w2, hid_p, hid_p).astype(compute_dtype)
    w3_p = _pad2(w3, hid_p, out_p).astype(compute_dtype)
    b1_p = _pad2(b1, 1, hid_p).astype(jnp.float32)
    b2_p = _pad2(b2, 1, hid_p).astype(jnp.float32)
    b3_p = _pad2(b3, 1, out_p).astype(jnp.float32)
    residents = (w1_p, b1_p, w2_p, b2_p, w3_p, b3_p)

    weight_bytes = sum(a.size * a.dtype.itemsize for a in residents)
    bytes_accessed = (x_in.size * x_in.dtype.itemsize
                      + weight_bytes
                      + out_size * b_p * 4)
    cost = pl.CostEstimate(
        flops=2 * b_p * (in_size * hid_p + hid_p * hid_p + hid_p * out_p),
        transcendentals=b_p * (2 * hid_p + out_p),
        bytes_accessed=bytes_accessed)

    def build_call(single_buffer_weights):
        spec_kwargs = {}
        if single_buffer_weights:
            # Constant-index blocks are never re-fetched; double-buffering them
            # is pure VMEM waste (matters at realistic hidden sizes, esp. v7x).
            spec_kwargs = dict(pipeline_mode=pl.Buffered(1))

        def resident(a):
            # Full array, same block every grid step -> stays VMEM-resident.
            return pl.BlockSpec(a.shape, lambda i: (0, 0), **spec_kwargs)

        # VMEM budget from the actual footprint: resident weights (+ x/out
        # double buffers + f32 intermediates).  Only pass an explicit limit
        # when it would exceed the default scoped budget.
        footprint = (weight_bytes * (1 if single_buffer_weights else 2)
                     + 2 * (tb * in_size * 4 + out_size * tb * 4)
                     + 6 * tb * hid_p * 4)
        vmem_limit = None
        if footprint > (12 << 20):
            vmem_limit = min(int(footprint * 1.5) + (2 << 20), 100 << 20)

        return pl.pallas_call(
            discriminator_kernel,
            out_shape=jax.ShapeDtypeStruct((out_size, b_p), jnp.float32),
            grid=grid,
            in_specs=[
                pl.BlockSpec((tb, in_size), lambda i: (i, 0)),  # x: batch-tiled
                resident(w1_p), resident(b1_p),
                resident(w2_p), resident(b2_p),
                resident(w3_p), resident(b3_p),
            ],
            out_specs=pl.BlockSpec((out_size, tb), lambda i: (0, i)),
            compiler_params=pltpu.CompilerParams(
                dimension_semantics=("parallel",),
                vmem_limit_bytes=vmem_limit),
            cost_estimate=cost,
        )

    args = (x_in, w1_p, b1_p, w2_p, b2_p, w3_p, b3_p)
    try:
        out_t = build_call(True)(*args)
    except Exception:
        # Fallback if this JAX build rejects pipeline_mode=pl.Buffered(1):
        # identical kernel, default (double) buffering for resident weights.
        out_t = build_call(False)(*args)

    # (out_size, b_p) -> (B, out_size); trailing batch padding sliced away.
    return out_t.T[:B, :]


def init_params(key, input_size, hidden_size, output_size):
    """Deterministic synthetic init mimicking nn.Linear shapes.
    PyTorch Linear weight is [out, in]; we store transposed [in, out]."""
    def linear(k, fan_in, fan_out):
        kw, kb = jax.random.split(k)
        bound = 1.0 / jnp.sqrt(fan_in)
        w = jax.random.uniform(kw, (fan_in, fan_out), jnp.float32, -bound, bound)
        b = jax.random.uniform(kb, (1, fan_out), jnp.float32, -bound, bound)
        return w, b

    k1, k2, k3 = jax.random.split(key, 3)
    return {
        "map1": linear(k1, input_size, hidden_size),
        "map2": linear(k2, hidden_size, hidden_size),
        "map3": linear(k3, hidden_size, output_size),
        # TODO(synk): map4/map5/batch1..4 exist in __init__ but are unused in forward.
    }


def reference_forward(x, params):
    w1, b1 = params["map1"]
    w2, b2 = params["map2"]
    w3, b3 = params["map3"]
    h = jax.nn.sigmoid(x @ w1 + b1)
    h = jax.nn.sigmoid(h @ w2 + b2)
    return jax.nn.sigmoid(h @ w3 + b3)


if __name__ == "__main__":
    key = jax.random.PRNGKey(0)
    kx, kp = jax.random.split(key)

    batch = 8
    input_size = 16
    hidden_size = 32
    output_size = 8

    x = jax.random.normal(kx, (batch, input_size), jnp.float32)
    params = init_params(kp, input_size, hidden_size, output_size)

    out = discriminator_forward(x, params)
    out = jax.block_until_ready(out)

    ref = reference_forward(x, params)
    assert out.shape == (batch, output_size)
    # bf16 matmuls vs f32 reference: sigmoid-bounded outputs, loose tolerance.
    assert jnp.allclose(out, ref, atol=2e-2, rtol=0.0), "mismatch vs reference"

    print("KERNEL_OK")
</pallas_src>

<mosaic_0001>
module attributes {stable_mosaic.version = 11 : i64} {
  func.func @discriminator_kernel(%arg0: i32, %arg1: memref<16x16xf32, #tpu.memory_space<vmem>>, %arg2: memref<16x128xbf16, #tpu.memory_space<vmem>>, %arg3: memref<1x128xf32, #tpu.memory_space<vmem>>, %arg4: memref<128x128xbf16, #tpu.memory_space<vmem>>, %arg5: memref<1x128xf32, #tpu.memory_space<vmem>>, %arg6: memref<128x128xbf16, #tpu.memory_space<vmem>>, %arg7: memref<1x128xf32, #tpu.memory_space<vmem>>, %arg8: memref<8x16xf32, #tpu.memory_space<vmem>>) attributes {dimension_semantics = [#tpu.dimension_semantics<parallel>], iteration_bounds = array<i64: 1>, scalar_prefetch = 0 : i64, scratch_operands = 0 : i64, tpu.core_type = #tpu.core_type<tc>, window_params = [{transform_indices = @transform_0, window_bounds = array<i64: 16, 16>}, {pipeline_mode = #tpu.pipeline_mode<synchronous>, transform_indices = @transform_1, window_bounds = array<i64: 16, 128>}, {pipeline_mode = #tpu.pipeline_mode<synchronous>, transform_indices = @transform_2, window_bounds = array<i64: 1, 128>}, {pipeline_mode = #tpu.pipeline_mode<synchronous>, transform_indices = @transform_3, window_bounds = array<i64: 128, 128>}, {pipeline_mode = #tpu.pipeline_mode<synchronous>, transform_indices = @transform_4, window_bounds = array<i64: 1, 128>}, {pipeline_mode = #tpu.pipeline_mode<synchronous>, transform_indices = @transform_5, window_bounds = array<i64: 128, 128>}, {pipeline_mode = #tpu.pipeline_mode<synchronous>, transform_indices = @transform_6, window_bounds = array<i64: 1, 128>}, {transform_indices = @transform_7, window_bounds = array<i64: 8, 16>}]} {
    %c0 = arith.constant 0 : index
    %c0_0 = arith.constant 0 : index
    %0 = vector.load %arg1[%c0, %c0_0] : memref<16x16xf32, #tpu.memory_space<vmem>>, vector<16x16xf32>
    %1 = arith.truncf %0 : vector<16x16xf32> to vector<16x16xbf16>
    %c0_1 = arith.constant 0 : index
    %c0_2 = arith.constant 0 : index
    %2 = vector.load %arg2[%c0_1, %c0_2] : memref<16x128xbf16, #tpu.memory_space<vmem>>, vector<16x128xbf16>
    %cst = arith.constant dense<0.000000e+00> : vector<16x128xf32>
    %3 = tpu.matmul %1, %2, %cst {dimension_numbers = #tpu.dot_dimension_numbers<[1], [0], [0], [1], [0, 0, 1, 1], [], []>} : vector<16x16xbf16>, vector<16x128xbf16>, vector<16x128xf32> -> vector<16x128xf32>
    %c0_3 = arith.constant 0 : index
    %c0_4 = arith.constant 0 : index
    %4 = vector.load %arg3[%c0_3, %c0_4] : memref<1x128xf32, #tpu.memory_space<vmem>>, vector<1x128xf32>
    %5 = vector.broadcast %4 : vector<1x128xf32> to vector<16x128xf32>
    %6 = arith.addf %3, %5 : vector<16x128xf32>
    %7 = arith.negf %6 : vector<16x128xf32>
    %8 = math.exp %7 : vector<16x128xf32>
    %cst_5 = arith.constant 1.000000e+00 : f32
    %9 = vector.broadcast %cst_5 : f32 to vector<16x128xf32>
    %10 = arith.addf %9, %8 : vector<16x128xf32>
    %11 = arith.divf %9, %10 : vector<16x128xf32>
    %12 = arith.truncf %11 : vector<16x128xf32> to vector<16x128xbf16>
    %c0_6 = arith.constant 0 : index
    %c0_7 = arith.constant 0 : index
    %13 = vector.load %arg4[%c0_6, %c0_7] : memref<128x128xbf16, #tpu.memory_space<vmem>>, vector<128x128xbf16>
    %cst_8 = arith.constant dense<0.000000e+00> : vector<16x128xf32>
    %14 = tpu.matmul %12, %13, %cst_8 {dimension_numbers = #tpu.dot_dimension_numbers<[1], [0], [0], [1], [0, 0, 1, 1], [], []>} : vector<16x128xbf16>, vector<128x128xbf16>, vector<16x128xf32> -> vector<16x128xf32>
    %c0_9 = arith.constant 0 : index
    %c0_10 = arith.constant 0 : index
    %15 = vector.load %arg5[%c0_9, %c0_10] : memref<1x128xf32, #tpu.memory_space<vmem>>, vector<1x128xf32>
    %16 = vector.broadcast %15 : vector<1x128xf32> to vector<16x128xf32>
    %17 = arith.addf %14, %16 : vector<16x128xf32>
    %18 = arith.negf %17 : vector<16x128xf32>
    %19 = math.exp %18 : vector<16x128xf32>
    %cst_11 = arith.constant 1.000000e+00 : f32
    %20 = vector.broadcast %cst_11 : f32 to vector<16x128xf32>
    %21 = arith.addf %20, %19 : vector<16x128xf32>
    %22 = arith.divf %20, %21 : vector<16x128xf32>
    %23 = arith.truncf %22 : vector<16x128xf32> to vector<16x128xbf16>
    %c0_12 = arith.constant 0 : index
    %c0_13 = arith.constant 0 : index
    %24 = vector.load %arg6[%c0_12, %c0_13] : memref<128x128xbf16, #tpu.memory_space<vmem>>, vector<128x128xbf16>
    %cst_14 = arith.constant dense<0.000000e+00> : vector<16x128xf32>
    %25 = tpu.matmul %23, %24, %cst_14 {dimension_numbers = #tpu.dot_dimension_numbers<[1], [0], [0], [1], [0, 0, 1, 1], [], []>} : vector<16x128xbf16>, vector<128x128xbf16>, vector<16x128xf32> -> vector<16x128xf32>
    %c0_15 = arith.constant 0 : index
    %c0_16 = arith.constant 0 : index
    %26 = vector.load %arg7[%c0_15, %c0_16] : memref<1x128xf32, #tpu.memory_space<vmem>>, vector<1x128xf32>
    %27 = vector.broadcast %26 : vector<1x128xf32> to vector<16x128xf32>
    %28 = arith.addf %25, %27 : vector<16x128xf32>
    %29 = arith.negf %28 : vector<16x128xf32>
    %30 = math.exp %29 : vector<16x128xf32>
    %cst_17 = arith.constant 1.000000e+00 : f32
    %31 = vector.broadcast %cst_17 : f32 to vector<16x128xf32>
    %32 = arith.addf %31, %30 : vector<16x128xf32>
    %33 = arith.divf %31, %32 : vector<16x128xf32>
    %34 = tpu.transpose %33, [1, 0] : vector<16x128xf32> -> vector<128x16xf32>
    %35 = vector.extract_strided_slice %34 {offsets = [0, 0], sizes = [8, 16], strides = [1, 1]} : vector<128x16xf32> to vector<8x16xf32>
    %c0_18 = arith.constant 0 : index
    %c0_19 = arith.constant 0 : index
    %36 = vector.load %arg8[%c0_18, %c0_19] : memref<8x16xf32, #tpu.memory_space<vmem>>, vector<8x16xf32>
    tpu.vector_store %arg8[%c0_18, %c0_19], %35 {strides = array<i32>} : memref<8x16xf32, #tpu.memory_space<vmem>>, vector<8x16xf32>,
    return
  }
  func.func @transform_0(%arg0: i32) -> (i32, i32) {
    %c0_i32 = arith.constant 0 : i32
    %c0_i32_0 = arith.constant 0 : i32
    return %arg0, %c0_i32 : i32, i32
  }
  func.func @transform_1(%arg0: i32) -> (i32, i32) {
    %c0_i32 = arith.constant 0 : i32
    %c0_i32_0 = arith.constant 0 : i32
    %c0_i32_1 = arith.constant 0 : i32
    return %c0_i32, %c0_i32_0 : i32, i32
  }
  func.func @transform_2(%arg0: i32) -> (i32, i32) {
    %c0_i32 = arith.constant 0 : i32
    %c0_i32_0 = arith.constant 0 : i32
    %c0_i32_1 = arith.constant 0 : i32
    return %c0_i32, %c0_i32_0 : i32, i32
  }
  func.func @transform_3(%arg0: i32) -> (i32, i32) {
    %c0_i32 = arith.constant 0 : i32
    %c0_i32_0 = arith.constant 0 : i32
    %c0_i32_1 = arith.constant 0 : i32
    return %c0_i32, %c0_i32_0 : i32, i32
  }
  func.func @transform_4(%arg0: i32) -> (i32, i32) {
    %c0_i32 = arith.constant 0 : i32
    %c0_i32_0 = arith.constant 0 : i32
    %c0_i32_1 = arith.constant 0 : i32
    return %c0_i32, %c0_i32_0 : i32, i32
  }
  func.func @transform_5(%arg0: i32) -> (i32, i32) {
    %c0_i32 = arith.constant 0 : i32
    %c0_i32_0 = arith.constant 0 : i32
    %c0_i32_1 = arith.constant 0 : i32
    return %c0_i32, %c0_i32_0 : i32, i32
  }
  func.func @transform_6(%arg0: i32) -> (i32, i32) {
    %c0_i32 = arith.constant 0 : i32
    %c0_i32_0 = arith.constant 0 : i32
    %c0_i32_1 = arith.constant 0 : i32
    return %c0_i32, %c0_i32_0 : i32, i32
  }
  func.func @transform_7(%arg0: i32) -> (i32, i32) {
    %c0_i32 = arith.constant 0 : i32
    %c0_i32_0 = arith.constant 0 : i32
    return %c0_i32, %arg0 : i32, i32
  }
}

module attributes {stable_mosaic.version = 11 : i64} {
  func.func @discriminator_kernel(%arg0: i32, %arg1: memref<16x16xf32, #tpu.memory_space<vmem>>, %arg2: memref<16x128xbf16, #tpu.memory_space<vmem>>, %arg3: memref<1x128xf32, #tpu.memory_space<vmem>>, %arg4: memref<128x128xbf16, #tpu.memory_space<vmem>>, %arg5: memref<1x128xf32, #tpu.memory_space<vmem>>, %arg6: memref<128x128xbf16, #tpu.memory_space<vmem>>, %arg7: memref<1x128xf32, #tpu.memory_space<vmem>>, %arg8: memref<8x16xf32, #tpu.memory_space<vmem>>) attributes {dimension_semantics = [#tpu.dimension_semantics<parallel>], iteration_bounds = array<i64: 1>, scalar_prefetch = 0 : i64, scratch_operands = 0 : i64, tpu.core_type = #tpu.core_type<tc>, window_params = [{transform_indices = @transform_0, window_bounds = array<i64: 16, 16>}, {pipeline_mode = #tpu.pipeline_mode<synchronous>, transform_indices = @transform_1, window_bounds = array<i64: 16, 128>}, {pipeline_mode = #tpu.pipeline_mode<synchronous>, transform_indices = @transform_2, window_bounds = array<i64: 1, 128>}, {pipeline_mode = #tpu.pipeline_mode<synchronous>, transform_indices = @transform_3, window_bounds = array<i64: 128, 128>}, {pipeline_mode = #tpu.pipeline_mode<synchronous>, transform_indices = @transform_4, window_bounds = array<i64: 1, 128>}, {pipeline_mode = #tpu.pipeline_mode<synchronous>, transform_indices = @transform_5, window_bounds = array<i64: 128, 128>}, {pipeline_mode = #tpu.pipeline_mode<synchronous>, transform_indices = @transform_6, window_bounds = array<i64: 1, 128>}, {transform_indices = @transform_7, window_bounds = array<i64: 8, 16>}]} {
    %c0 = arith.constant 0 : index
    %c0_0 = arith.constant 0 : index
    %0 = vector.load %arg1[%c0, %c0_0] : memref<16x16xf32, #tpu.memory_space<vmem>>, vector<16x16xf32>
    %1 = arith.truncf %0 : vector<16x16xf32> to vector<16x16xbf16>
    %c0_1 = arith.constant 0 : index
    %c0_2 = arith.constant 0 : index
    %2 = vector.load %arg2[%c0_1, %c0_2] : memref<16x128xbf16, #tpu.memory_space<vmem>>, vector<16x128xbf16>
    %cst = arith.constant dense<0.000000e+00> : vector<16x128xf32>
    %3 = tpu.matmul %1, %2, %cst {dimension_numbers = #tpu.dot_dimension_numbers<[1], [0], [0], [1], [0, 0, 1, 1], [], []>} : vector<16x16xbf16>, vector<16x128xbf16>, vector<16x128xf32> -> vector<16x128xf32>
    %c0_3 = arith.constant 0 : index
    %c0_4 = arith.constant 0 : index
    %4 = vector.load %arg3[%c0_3, %c0_4] : memref<1x128xf32, #tpu.memory_space<vmem>>, vector<1x128xf32>
    %5 = vector.broadcast %4 : vector<1x128xf32> to vector<16x128xf32>
    %6 = arith.addf %3, %5 : vector<16x128xf32>
    %7 = arith.negf %6 : vector<16x128xf32>
    %8 = math.exp %7 : vector<16x128xf32>
    %cst_5 = arith.constant 1.000000e+00 : f32
    %9 = vector.broadcast %cst_5 : f32 to vector<16x128xf32>
    %10 = arith.addf %9, %8 : vector<16x128xf32>
    %11 = arith.divf %9, %10 : vector<16x128xf32>
    %12 = arith.truncf %11 : vector<16x128xf32> to vector<16x128xbf16>
    %c0_6 = arith.constant 0 : index
    %c0_7 = arith.constant 0 : index
    %13 = vector.load %arg4[%c0_6, %c0_7] : memref<128x128xbf16, #tpu.memory_space<vmem>>, vector<128x128xbf16>
    %cst_8 = arith.constant dense<0.000000e+00> : vector<16x128xf32>
    %14 = tpu.matmul %12, %13, %cst_8 {dimension_numbers = #tpu.dot_dimension_numbers<[1], [0], [0], [1], [0, 0, 1, 1], [], []>} : vector<16x128xbf16>, vector<128x128xbf16>, vector<16x128xf32> -> vector<16x128xf32>
    %c0_9 = arith.constant 0 : index
    %c0_10 = arith.constant 0 : index
    %15 = vector.load %arg5[%c0_9, %c0_10] : memref<1x128xf32, #tpu.memory_space<vmem>>, vector<1x128xf32>
    %16 = vector.broadcast %15 : vector<1x128xf32> to vector<16x128xf32>
    %17 = arith.addf %14, %16 : vector<16x128xf32>
    %18 = arith.negf %17 : vector<16x128xf32>
    %19 = math.exp %18 : vector<16x128xf32>
    %cst_11 = arith.constant 1.000000e+00 : f32
    %20 = vector.broadcast %cst_11 : f32 to vector<16x128xf32>
    %21 = arith.addf %20, %19 : vector<16x128xf32>
    %22 = arith.divf %20, %21 : vector<16x128xf32>
    %23 = arith.truncf %22 : vector<16x128xf32> to vector<16x128xbf16>
    %c0_12 = arith.constant 0 : index
    %c0_13 = arith.constant 0 : index
    %24 = vector.load %arg6[%c0_12, %c0_13] : memref<128x128xbf16, #tpu.memory_space<vmem>>, vector<128x128xbf16>
    %cst_14 = arith.constant dense<0.000000e+00> : vector<16x128xf32>
    %25 = tpu.matmul %23, %24, %cst_14 {dimension_numbers = #tpu.dot_dimension_numbers<[1], [0], [0], [1], [0, 0, 1, 1], [], []>} : vector<16x128xbf16>, vector<128x128xbf16>, vector<16x128xf32> -> vector<16x128xf32>
    %c0_15 = arith.constant 0 : index
    %c0_16 = arith.constant 0 : index
    %26 = vector.load %arg7[%c0_15, %c0_16] : memref<1x128xf32, #tpu.memory_space<vmem>>, vector<1x128xf32>
    %27 = vector.broadcast %26 : vector<1x128xf32> to vector<16x128xf32>
    %28 = arith.addf %25, %27 : vector<16x128xf32>
    %29 = arith.negf %28 : vector<16x128xf32>
    %30 = math.exp %29 : vector<16x128xf32>
    %cst_17 = arith.constant 1.000000e+00 : f32
    %31 = vector.broadcast %cst_17 : f32 to vector<16x128xf32>
    %32 = arith.addf %31, %30 : vector<16x128xf32>
    %33 = arith.divf %31, %32 : vector<16x128xf32>
    %34 = tpu.transpose %33, [1, 0] : vector<16x128xf32> -> vector<128x16xf32>
    %35 = vector.extract_strided_slice %34 {offsets = [0, 0], sizes = [8, 16], strides = [1, 1]} : vector<128x16xf32> to vector<8x16xf32>
    %c0_18 = arith.constant 0 : index
    %c0_19 = arith.constant 0 : index
    %36 = vector.load %arg8[%c0_18, %c0_19] : memref<8x16xf32, #tpu.memory_space<vmem>>, vector<8x16xf32>
    tpu.vector_store %arg8[%c0_18, %c0_19], %35 {strides = array<i32>} : memref<8x16xf32, #tpu.memory_space<vmem>>, vector<8x16xf32>,
    return
  }
  func.func @transform_0(%arg0: i32) -> (i32, i32) {
    %c0_i32 = arith.constant 0 : i32
    %c0_i32_0 = arith.constant 0 : i32
    return %arg0, %c0_i32 : i32, i32
  }
  func.func @transform_1(%arg0: i32) -> (i32, i32) {
    %c0_i32 = arith.constant 0 : i32
    %c0_i32_0 = arith.constant 0 : i32
    %c0_i32_1 = arith.constant 0 : i32
    return %c0_i32, %c0_i32_0 : i32, i32
  }
  func.func @transform_2(%arg0: i32) -> (i32, i32) {
    %c0_i32 = arith.constant 0 : i32
    %c0_i32_0 = arith.constant 0 : i32
    %c0_i32_1 = arith.constant 0 : i32
    return %c0_i32, %c0_i32_0 : i32, i32
  }
  func.func @transform_3(%arg0: i32) -> (i32, i32) {
    %c0_i32 = arith.constant 0 : i32
    %c0_i32_0 = arith.constant 0 : i32
    %c0_i32_1 = arith.constant 0 : i32
    return %c0_i32, %c0_i32_0 : i32, i32
  }
  func.func @transform_4(%arg0: i32) -> (i32, i32) {
    %c0_i32 = arith.constant 0 : i32
    %c0_i32_0 = arith.constant 0 : i32
    %c0_i32_1 = arith.constant 0 : i32
    return %c0_i32, %c0_i32_0 : i32, i32
  }
  func.func @transform_5(%arg0: i32) -> (i32, i32) {
    %c0_i32 = arith.constant 0 : i32
    %c0_i32_0 = arith.constant 0 : i32
    %c0_i32_1 = arith.constant 0 : i32
    return %c0_i32, %c0_i32_0 : i32, i32
  }
  func.func @transform_6(%arg0: i32) -> (i32, i32) {
    %c0_i32 = arith.constant 0 : i32
    %c0_i32_0 = arith.constant 0 : i32
    %c0_i32_1 = arith.constant 0 : i32
    return %c0_i32, %c0_i32_0 : i32, i32
  }
  func.func @transform_7(%arg0: i32) -> (i32, i32) {
    %c0_i32 = arith.constant 0 : i32
    %c0_i32_0 = arith.constant 0 : i32
    return %c0_i32, %arg0 : i32, i32
  }
}

</mosaic_0001>

<llo_original>
// kernel: tpu_custom_call.1
$region0: #{tpu_custom_call.1}
  #allocation0 [shape = 'u32[]', space=smem, size = 0x4, offset = 0x4, fixed_abs, tag = 'smem constant byte address 0x4 - core index']
  #allocation1 [shape = 'u32[72,128]{1,0:T(1,128)}', space=vmem, size = 0x9000, scoped, tag = 'internal scratch']
  %s0 = inlined_call_operand.hbm [shape: f32[16,16], index: 0, kind: input, shape index: {}]
  %s1 = inlined_call_operand.hbm [shape: bf16[16,128], index: 1, kind: input, shape index: {}]
  %s2 = inlined_call_operand.vmem [shape: f32[1,128], index: 2, kind: input, shape index: {}]
  %s3 = inlined_call_operand.hbm [shape: bf16[128,128], index: 3, kind: input, shape index: {}]
  %s4 = inlined_call_operand.vmem [shape: f32[1,128], index: 4, kind: input, shape index: {}]
  %s5 = inlined_call_operand.hbm [shape: bf16[128,128], index: 5, kind: input, shape index: {}]
  %s6 = inlined_call_operand.vmem [shape: f32[1,128], index: 6, kind: input, shape index: {}]
  %s7 = inlined_call_operand.hbm [shape: f32[8,16], index: 7, kind: output, shape index: {}]
  %s8 = sld [smem:[#allocation0]]
  $region54: #{tpu_custom_call.1} parent=0
    _
  %s10 = ssub.s32 1, %s8
  %s11 = scalar_select 0, %s10, %s8
  $region1: #{tpu_custom_call.1} parent=0
    #allocation2 [shape = 'u8[8192]{0}', space=vmem, size = 0x2000, scoped, tag = 'input window, operand 0, single buffered']
    #allocation3 [shape = 's32[1]{0}', space=sflag, size = 0x4, scoped, tag = 'scoped memory for tpu_custom_call.1']
    #allocation4 [shape = 's32[1]{0}', space=sflag, size = 0x4, scoped, tag = 'scoped memory for tpu_custom_call.1']
    #allocation5 [shape = 'u8[4096]{0}', space=vmem, size = 0x1000, scoped, tag = 'input window, operand 1, single buffered']
    #allocation6 [shape = 's32[1]{0}', space=sflag, size = 0x4, scoped, tag = 'scoped memory for tpu_custom_call.1']
    #allocation7 [shape = 'u8[32768]{0}', space=vmem, size = 0x8000, scoped, tag = 'input window, operand 3, single buffered']
    #allocation8 [shape = 'u8[32768]{0}', space=vmem, size = 0x8000, scoped, tag = 'input window, operand 5, single buffered']
    #allocation9 [shape = 's32[1]{0}', space=sflag, size = 0x4, scoped, tag = 'scoped memory for tpu_custom_call.1']
    #allocation10 [shape = 'u8[4096]{0}', space=vmem, size = 0x1000, scoped, tag = 'output window, operand 0, single buffered']
    %12 = vsyncpa [#allocation3], 0
    %13 = vsyncpa [#allocation6], 0
    %14 = vsyncpa [#allocation9], 0
    %15 = vsyncpa [#allocation4], 0
    // Predicated region
    $region2: #{tpu_custom_call.1} parent=1 // pred_check
      _
    $region3: #{tpu_custom_call.1} parent=1 // pred_check_branch
      %17 = sbr.rel (0) target = $region5
    $region4: #{tpu_custom_call.1} parent=1 // pred_region
      %19 = vsyncadd [#allocation3], 0
      %s20 = sshll.u32 %s0, 4
      %s21 = int_to_ptr.hbm [resolvable:$true] %s20
      %s22 = sshll.u32 [#allocation2], 4
      %s23 = int_to_ptr.vmem [resolvable:$true] %s22
      %28 = dma.hbm_to_vmem [thread:$0]  %s21, 256, %s23, [#allocation3], 128, 128, 8
    $region5: #{tpu_custom_call.1} parent=1 // pred_fallthru
      _
    // Predicated region
    $region6: #{tpu_custom_call.1} parent=1 // pred_check
      _
    $region7: #{tpu_custom_call.1} parent=1 // pred_check_branch
      %30 = sbr.rel (0) target = $region9
    $region8: #{tpu_custom_call.1} parent=1 // pred_region
      %32 = vsyncadd [#allocation6], 0
      %s33 = sshll.u32 %s1, 4
      %s34 = int_to_ptr.hbm [resolvable:$true] %s33
      %s35 = sshll.u32 [#allocation5], 4
      %s36 = int_to_ptr.vmem [resolvable:$true] %s35
      %41 = dma.hbm_to_vmem [thread:$0]  %s34, 128, %s36, [#allocation6], 64, 64, 4
    $region9: #{tpu_custom_call.1} parent=1 // pred_fallthru
      _
    // Predicated region
    $region10: #{tpu_custom_call.1} parent=1 // pred_check
      _
    $region11: #{tpu_custom_call.1} parent=1 // pred_check_branch
      %43 = sbr.rel (0) target = $region13
    $region12: #{tpu_custom_call.1} parent=1 // pred_region
      _
    $region13: #{tpu_custom_call.1} parent=1 // pred_fallthru
      _
    // Predicated region
    $region14: #{tpu_custom_call.1} parent=1 // pred_check
      _
    $region15: #{tpu_custom_call.1} parent=1 // pred_check_branch
      %45 = sbr.rel (0) target = $region17
    $region16: #{tpu_custom_call.1} parent=1 // pred_region
      %47 = vsyncadd [#allocation6], 0
      %s48 = sshll.u32 %s3, 4
      %s49 = int_to_ptr.hbm [resolvable:$true] %s48
      %s50 = sshll.u32 [#allocation7], 4
      %s51 = int_to_ptr.vmem [resolvable:$true] %s50
      %56 = dma.hbm_to_vmem [thread:$0]  %s49, 1024, %s51, [#allocation6], 64, 64, 4
    $region17: #{tpu_custom_call.1} parent=1 // pred_fallthru
      _
    // Predicated region
    $region18: #{tpu_custom_call.1} parent=1 // pred_check
      _
    $region19: #{tpu_custom_call.1} parent=1 // pred_check_branch
      %58 = sbr.rel (0) target = $region21
    $region20: #{tpu_custom_call.1} parent=1 // pred_region
      _
    $region21: #{tpu_custom_call.1} parent=1 // pred_fallthru
      _
    // Predicated region
    $region22: #{tpu_custom_call.1} parent=1 // pred_check
      _
    $region23: #{tpu_custom_call.1} parent=1 // pred_check_branch
      %60 = sbr.rel (0) target = $region25
    $region24: #{tpu_custom_call.1} parent=1 // pred_region
      %62 = vsyncadd [#allocation9], 0
      %s63 = sshll.u32 %s5, 4
      %s64 = int_to_ptr.hbm [resolvable:$true] %s63
      %s65 = sshll.u32 [#allocation8], 4
      %s66 = int_to_ptr.vmem [resolvable:$true] %s65
      %71 = dma.hbm_to_vmem [thread:$0]  %s64, 1024, %s66, [#allocation9], 64, 64, 4
    $region25: #{tpu_custom_call.1} parent=1 // pred_fallthru
      _
    // Predicated region
    $region26: #{tpu_custom_call.1} parent=1 // pred_check
      _
    $region27: #{tpu_custom_call.1} parent=1 // pred_check_branch
      %73 = sbr.rel (0) target = $region29
    $region28: #{tpu_custom_call.1} parent=1 // pred_region
      _
    $region29: #{tpu_custom_call.1} parent=1 // pred_fallthru
      _
    // Predicated region
    $region30: #{tpu_custom_call.1} parent=1 // pred_check
      _
    $region31: #{tpu_custom_call.1} parent=1 // pred_check_branch
      %75 = sbr.rel (0) target = $region33
    $region32: #{tpu_custom_call.1} parent=1 // pred_region
      %77 = dma.done [#allocation3], 256
    $region33: #{tpu_custom_call.1} parent=1 // pred_fallthru
      _
    // Predicated region
    $region34: #{tpu_custom_call.1} parent=1 // pred_check
      _
    $region35: #{tpu_custom_call.1} parent=1 // pred_check_branch
      %79 = sbr.rel (0) target = $region37
    $region36: #{tpu_custom_call.1} parent=1 // pred_region
      %81 = dma.done [#allocation6], 128
    $region37: #{tpu_custom_call.1} parent=1 // pred_fallthru
      _
    // Predicated region
    $region38: #{tpu_custom_call.1} parent=1 // pred_check
      _
    $region39: #{tpu_custom_call.1} parent=1 // pred_check_branch
      %83 = sbr.rel (0) target = $region41
    $region40: #{tpu_custom_call.1} parent=1 // pred_region
      %85 = dma.done [#allocation6], 1024
    $region41: #{tpu_custom_call.1} parent=1 // pred_fallthru
      _
    // Predicated region
    $region42: #{tpu_custom_call.1} parent=1 // pred_check
      _
    $region43: #{tpu_custom_call.1} parent=1 // pred_check_branch
      %87 = sbr.rel (0) target = $region45
    $region44: #{tpu_custom_call.1} parent=1 // pred_region
      %89 = dma.done [#allocation9], 1024
    $region45: #{tpu_custom_call.1} parent=1 // pred_fallthru
      _
    %v91 = vld [vmem:[#allocation2] sm:$0xff]
    %v92 = vld [vmem:[#allocation2 + $0x8] sm:$0xff]
    %v93 = vpack.c.bf16 %v92, %v91
    %v94 = vld [vmem:[#allocation5] sm:$0xf]
    %v95 = vld [vmem:[#allocation5 + $0x4] sm:$0xf]
    %v96 = vld [vmem:[%s2] sm:$0x1]
    %v98 = vperm.slane %v96, 0
    %v102 = vunpack.c.l.b16 %v94
    %v103 = vunpack.c.l.b16 %v95
    %v104 = vpack.c.b16 %v103, %v102
    %vm106 = vcmask 130048
    %v108 = vsel %vm106, %v93, 0
    %110 = vmatpush.bf16.msra.mxu0 0
    %111 = vmatpush.bf16.msra.mxu0 0
    %112 = vmatpush.bf16.msra.mxu0 0
    %113 = vmatpush.bf16.msra.mxu0 0
    %114 = vmatpush.bf16.msra.mxu0 0
    %115 = vmatpush.bf16.msra.mxu0 0
    %116 = vmatpush.bf16.msra.mxu0 0
    %117 = vmatpush.bf16.msra.mxu0 %v104
    %118 = vmatmul.bf16.gmra.mxu0 %v108
    %v119 = vpop.f32.mrf.mxu0
    %v120 = vadd.f32 %v98, %v119
    %v121 = vpop.f32.mrf.mxu0
    %v122 = vadd.f32 %v98, %v121
    %123 = vdwg.mxu0
    %v124 = vxor.u32 %v120, 2147483648
    %v125 = vxor.u32 %v122, 2147483648
    %v126 = vmul.f32 %v124, 1.442695
    %v127 = vpow.pop %v126
    %v128 = vmul.f32 %v125, 1.442695
    %v129 = vpow.pop %v128
    %v130 = vadd.f32 %v127, 1.0
    %v131 = vadd.f32 %v129, 1.0
    %v132 = vrcp.pop %v130
    %v133 = vmul.f32 %v130, %v132
    %v134 = vsub.f32 1.0, %v133
    %v135 = vmul.f32 %v132, %v134
    %v136 = vadd.f32 %v132, %v135
    %vm137 = vweird.f32 %v130
    %vm138 = vweird.f32 %v132
    %vm139 = vmor %vm137, %vm138
    %v140 = vsel %vm139, %v132, %v136
    %v141 = vand.u32 2147483647, %v130
    %vm142 = vcmp.eq.f32.partialorder %v141, 8.507059e+37
    %v143 = vand.u32 %v130, 2147483648
    %v144 = vor.u32 1.1754944e-38, %v143
    %v145 = vsel %vm142, %v144, %v140
    %v146 = vmul.f32 1.0, %v145
    %v147 = vrcp.pop %v131
    %v148 = vmul.f32 %v131, %v147
    %v149 = vsub.f32 1.0, %v148
    %v150 = vmul.f32 %v147, %v149
    %v151 = vadd.f32 %v147, %v150
    %vm152 = vweird.f32 %v131
    %vm153 = vweird.f32 %v147
    %vm154 = vmor %vm152, %vm153
    %v155 = vsel %vm154, %v147, %v151
    %v156 = vand.u32 2147483647, %v131
    %vm157 = vcmp.eq.f32.partialorder %v156, 8.507059e+37
    %v158 = vand.u32 %v131, 2147483648
    %v159 = vor.u32 1.1754944e-38, %v158
    %v160 = vsel %vm157, %v159, %v155
    %v161 = vmul.f32 1.0, %v160
    %v162 = vpack.c.bf16 %v161, %v146
    %v163 = vld [vmem:[#allocation7] sm:$0xf]
    %v164 = vld [vmem:[#allocation7 + $0x4] sm:$0xf]
    %v165 = vld [vmem:[#allocation7 + $0x8] sm:$0xf]
    %v166 = vld [vmem:[#allocation7 + $0xc] sm:$0xf]
    %v167 = vld [vmem:[#allocation7 + $0x10] sm:$0xf]
    %v168 = vld [vmem:[#allocation7 + $0x14] sm:$0xf]
    %v169 = vld [vmem:[#allocation7 + $0x18] sm:$0xf]
    %v170 = vld [vmem:[#allocation7 + $0x1c] sm:$0xf]
    %v171 = vld [vmem:[#allocation7 + $0x20] sm:$0xf]
    %v172 = vld [vmem:[#allocation7 + $0x24] sm:$0xf]
    %v173 = vld [vmem:[#allocation7 + $0x28] sm:$0xf]
    %v174 = vld [vmem:[#allocation7 + $0x2c] sm:$0xf]
    %v175 = vld [vmem:[#allocation7 + $0x30] sm:$0xf]
    %v176 = vld [vmem:[#allocation7 + $0x34] sm:$0xf]
    %v177 = vld [vmem:[#allocation7 + $0x38] sm:$0xf]
    %v178 = vld [vmem:[#allocation7 + $0x3c] sm:$0xf]
    %v179 = vld [vmem:[%s4] sm:$0x1]
    %v181 = vperm.slane %v179, 0
    %v199 = vunpack.c.l.b16 %v163
    %v200 = vunpack.c.l.b16 %v164
    %v201 = vunpack.c.l.b16 %v165
    %v202 = vunpack.c.l.b16 %v166
    %v203 = vunpack.c.l.b16 %v167
    %v204 = vunpack.c.l.b16 %v168
    %v205 = vunpack.c.l.b16 %v169
    %v206 = vunpack.c.l.b16 %v170
    %v207 = vunpack.c.l.b16 %v171
    %v208 = vunpack.c.l.b16 %v172
    %v209 = vunpack.c.l.b16 %v173
    %v210 = vunpack.c.l.b16 %v174
    %v211 = vunpack.c.l.b16 %v175
    %v212 = vunpack.c.l.b16 %v176
    %v213 = vunpack.c.l.b16 %v177
    %v214 = vunpack.c.l.b16 %v178
    %v215 = vpack.c.b16 %v200, %v199
    %v216 = vpack.c.b16 %v202, %v201
    %v217 = vpack.c.b16 %v204, %v203
    %v218 = vpack.c.b16 %v206, %v205
    %v219 = vpack.c.b16 %v208, %v207
    %v220 = vpack.c.b16 %v210, %v209
    %v221 = vpack.c.b16 %v212, %v211
    %v222 = vpack.c.b16 %v214, %v213
    %231 = vmatpush.bf16.msra.mxu0 %v222
    %232 = vmatpush.bf16.msra.mxu0 %v221
    %233 = vmatpush.bf16.msra.mxu0 %v220
    %234 = vmatpush.bf16.msra.mxu0 %v219
    %235 = vmatpush.bf16.msra.mxu0 %v218
    %236 = vmatpush.bf16.msra.mxu0 %v217
    %237 = vmatpush.bf16.msra.mxu0 %v216
    %238 = vmatpush.bf16.msra.mxu0 %v215
    %239 = vmatmul.bf16.gmra.mxu0 %v162
    %v240 = vpop.f32.mrf.mxu0
    %v241 = vadd.f32 %v181, %v240
    %v242 = vpop.f32.mrf.mxu0
    %v243 = vadd.f32 %v181, %v242
    %244 = vdwg.mxu0
    %v245 = vxor.u32 %v241, 2147483648
    %v246 = vxor.u32 %v243, 2147483648
    %v247 = vmul.f32 %v245, 1.442695
    %v248 = vpow.pop %v247
    %v249 = vmul.f32 %v246, 1.442695
    %v250 = vpow.pop %v249
    %v251 = vadd.f32 %v248, 1.0
    %v252 = vadd.f32 %v250, 1.0
    %v253 = vrcp.pop %v251
    %v254 = vmul.f32 %v251, %v253
    %v255 = vsub.f32 1.0, %v254
    %v256 = vmul.f32 %v253, %v255
    %v257 = vadd.f32 %v253, %v256
    %vm258 = vweird.f32 %v251
    %vm259 = vweird.f32 %v253
    %vm260 = vmor %vm258, %vm259
    %v261 = vsel %vm260, %v253, %v257
    %v262 = vand.u32 2147483647, %v251
    %vm263 = vcmp.eq.f32.partialorder %v262, 8.507059e+37
    %v264 = vand.u32 %v251, 2147483648
    %v265 = vor.u32 1.1754944e-38, %v264
    %v266 = vsel %vm263, %v265, %v261
    %v267 = vmul.f32 1.0, %v266
    %v268 = vrcp.pop %v252
    %v269 = vmul.f32 %v252, %v268
    %v270 = vsub.f32 1.0, %v269
    %v271 = vmul.f32 %v268, %v270
    %v272 = vadd.f32 %v268, %v271
    %vm273 = vweird.f32 %v252
    %vm274 = vweird.f32 %v268
    %vm275 = vmor %vm273, %vm274
    %v276 = vsel %vm275, %v268, %v272
    %v277 = vand.u32 2147483647, %v252
    %vm278 = vcmp.eq.f32.partialorder %v277, 8.507059e+37
    %v279 = vand.u32 %v252, 2147483648
    %v280 = vor.u32 1.1754944e-38, %v279
    %v281 = vsel %vm278, %v280, %v276
    %v282 = vmul.f32 1.0, %v281
    %v283 = vpack.c.bf16 %v282, %v267
    %v284 = vld [vmem:[#allocation8] sm:$0xf]
    %v285 = vld [vmem:[#allocation8 + $0x4] sm:$0xf]
    %v286 = vld [vmem:[#allocation8 + $0x8] sm:$0xf]
    %v287 = vld [vmem:[#allocation8 + $0xc] sm:$0xf]
    %v288 = vld [vmem:[#allocation8 + $0x10] sm:$0xf]
    %v289 = vld [vmem:[#allocation8 + $0x14] sm:$0xf]
    %v290 = vld [vmem:[#allocation8 + $0x18] sm:$0xf]
    %v291 = vld [vmem:[#allocation8 + $0x1c] sm:$0xf]
    %v292 = vld [vmem:[#allocation8 + $0x20] sm:$0xf]
    %v293 = vld [vmem:[#allocation8 + $0x24] sm:$0xf]
    %v294 = vld [vmem:[#allocation8 + $0x28] sm:$0xf]
    %v295 = vld [vmem:[#allocation8 + $0x2c] sm:$0xf]
    %v296 = vld [vmem:[#allocation8 + $0x30] sm:$0xf]
    %v297 = vld [vmem:[#allocation8 + $0x34] sm:$0xf]
    %v298 = vld [vmem:[#allocation8 + $0x38] sm:$0xf]
    %v299 = vld [vmem:[#allocation8 + $0x3c] sm:$0xf]
    %v300 = vld [vmem:[%s6] sm:$0x1]
    %v302 = vperm.slane %v300, 0
    %v320 = vunpack.c.l.b16 %v284
    %v321 = vunpack.c.l.b16 %v285
    %v322 = vunpack.c.l.b16 %v286
    %v323 = vunpack.c.l.b16 %v287
    %v324 = vunpack.c.l.b16 %v288
    %v325 = vunpack.c.l.b16 %v289
    %v326 = vunpack.c.l.b16 %v290
    %v327 = vunpack.c.l.b16 %v291
    %v328 = vunpack.c.l.b16 %v292
    %v329 = vunpack.c.l.b16 %v293
    %v330 = vunpack.c.l.b16 %v294
    %v331 = vunpack.c.l.b16 %v295
    %v332 = vunpack.c.l.b16 %v296
    %v333 = vunpack.c.l.b16 %v297
    %v334 = vunpack.c.l.b16 %v298
    %v335 = vunpack.c.l.b16 %v299
    %v336 = vpack.c.b16 %v321, %v320
    %v337 = vpack.c.b16 %v323, %v322
    %v338 = vpack.c.b16 %v325, %v324
    %v339 = vpack.c.b16 %v327, %v326
    %v340 = vpack.c.b16 %v329, %v328
    %v341 = vpack.c.b16 %v331, %v330
    %v342 = vpack.c.b16 %v333, %v332
    %v343 = vpack.c.b16 %v335, %v334
    %352 = vmatpush.bf16.msra.mxu0 %v343
    %353 = vmatpush.bf16.msra.mxu0 %v342
    %354 = vmatpush.bf16.msra.mxu0 %v341
    %355 = vmatpush.bf16.msra.mxu0 %v340
    %356 = vmatpush.bf16.msra.mxu0 %v339
    %357 = vmatpush.bf16.msra.mxu0 %v338
    %358 = vmatpush.bf16.msra.mxu0 %v337
    %359 = vmatpush.bf16.msra.mxu0 %v336
    %360 = vmatmul.bf16.gmra.mxu0 %v283
    %v361 = vpop.f32.mrf.mxu0
    %v362 = vadd.f32 %v302, %v361
    %v363 = vpop.f32.mrf.mxu0
    %v364 = vadd.f32 %v302, %v363
    %365 = vdwg.mxu0
    %v366 = vxor.u32 %v362, 2147483648
    %v367 = vxor.u32 %v364, 2147483648
    %v368 = vmul.f32 %v366, 1.442695
    %v369 = vpow.pop %v368
    %v370 = vmul.f32 %v367, 1.442695
    %v371 = vpow.pop %v370
    %v372 = vadd.f32 %v369, 1.0
    %v373 = vadd.f32 %v371, 1.0
    %v374 = vrcp.pop %v372
    %v375 = vmul.f32 %v372, %v374
    %v376 = vsub.f32 1.0, %v375
    %v377 = vmul.f32 %v374, %v376
    %v378 = vadd.f32 %v374, %v377
    %vm379 = vweird.f32 %v372
    %vm380 = vweird.f32 %v374
    %vm381 = vmor %vm379, %vm380
    %v382 = vsel %vm381, %v374, %v378
    %v383 = vand.u32 2147483647, %v372
    %vm384 = vcmp.eq.f32.partialorder %v383, 8.507059e+37
    %v385 = vand.u32 %v372, 2147483648
    %v386 = vor.u32 1.1754944e-38, %v385
    %v387 = vsel %vm384, %v386, %v382
    %v388 = vmul.f32 1.0, %v387
    %v389 = vrcp.pop %v373
    %v390 = vmul.f32 %v373, %v389
    %v391 = vsub.f32 1.0, %v390
    %v392 = vmul.f32 %v389, %v391
    %v393 = vadd.f32 %v389, %v392
    %vm394 = vweird.f32 %v373
    %vm395 = vweird.f32 %v389
    %vm396 = vmor %vm394, %vm395
    %v397 = vsel %vm396, %v389, %v393
    %v398 = vand.u32 2147483647, %v373
    %vm399 = vcmp.eq.f32.partialorder %v398, 8.507059e+37
    %v400 = vand.u32 %v373, 2147483648
    %v401 = vor.u32 1.1754944e-38, %v400
    %v402 = vsel %vm399, %v401, %v397
    %v403 = vmul.f32 1.0, %v402
    %404 = vxpose.xlu0.b32.start [1/16] %v388, 128
    %405 = vxpose.xlu0.b32.cont [2/16] %v403, 128
    %406 = vxpose.xlu0.b32.cont [3/16] 0.0, 128
    %407 = vxpose.xlu0.b32.cont [4/16] 0.0, 128
    %408 = vxpose.xlu0.b32.cont [5/16] 0.0, 128
    %409 = vxpose.xlu0.b32.cont [6/16] 0.0, 128
    %410 = vxpose.xlu0.b32.cont [7/16] 0.0, 128
    %411 = vxpose.xlu0.b32.cont [8/16] 0.0, 128
    %412 = vxpose.xlu0.b32.cont [9/16] 0.0, 128
    %413 = vxpose.xlu0.b32.cont [10/16] 0.0, 128
    %414 = vxpose.xlu0.b32.cont [11/16] 0.0, 128
    %415 = vxpose.xlu0.b32.cont [12/16] 0.0, 128
    %416 = vxpose.xlu0.b32.cont [13/16] 0.0, 128
    %417 = vxpose.xlu0.b32.cont [14/16] 0.0, 128
    %418 = vxpose.xlu0.b32.cont [15/16] 0.0, 128
    %419 = vxpose.xlu0.b32.end [16/16] 0.0, 128
    %v420 = vpop.trf.xlu0
    %v421 = vpop.trf.xlu0
    %v422 = vpop.trf.xlu0
    %v423 = vpop.trf.xlu0
    %v424 = vpop.trf.xlu0
    %v425 = vpop.trf.xlu0
    %v426 = vpop.trf.xlu0
    %v427 = vpop.trf.xlu0
    %v428 = vpop.trf.xlu0
    %v429 = vpop.trf.xlu0
    %v430 = vpop.trf.xlu0
    %v431 = vpop.trf.xlu0
    %v432 = vpop.trf.xlu0
    %v433 = vpop.trf.xlu0
    %v434 = vpop.trf.xlu0
    %v435 = vpop.trf.xlu0
    %436 = vst.msk [vmem:[#allocation10] sm:$0xff] %vm106, %v420
    // Predicated region
    $region46: #{tpu_custom_call.1} parent=1 // pred_check
      _
    $region47: #{tpu_custom_call.1} parent=1 // pred_check_branch
      %438 = sbr.rel (0) target = $region49
    $region48: #{tpu_custom_call.1} parent=1 // pred_region
      %440 = vsyncadd [#allocation4], 0
      %s442 = sshll.u32 [#allocation10], 4
      %s443 = int_to_ptr.vmem [resolvable:$true] %s442
      %s444 = sshll.u32 %s7, 4
      %s445 = int_to_ptr.hbm [resolvable:$true] %s444
      %447 = dma.vmem_to_hbm [thread:$0]  %s443, 128, %s445, [#allocation4]
    $region49: #{tpu_custom_call.1} parent=1 // pred_fallthru
      _
    // Predicated region
    $region50: #{tpu_custom_call.1} parent=1 // pred_check
      _
    $region51: #{tpu_custom_call.1} parent=1 // pred_check_branch
      %449 = sbr.rel (0) target = $region53
    $region52: #{tpu_custom_call.1} parent=1 // pred_region
      %451 = dma.done [#allocation4], 128
    $region53: #{tpu_custom_call.1} parent=1 // pred_fallthru
      _
    %452 = vsyncpa [#allocation3], 1
    %453 = vsyncpa [#allocation6], 1
    %454 = vsyncpa [#allocation9], 1
    %455 = vsyncpa [#allocation4], 1

// kernel: tpu_custom_call.1
$region0: #{tpu_custom_call.1}
  #allocation0 [shape = 'u32[]', space=smem, size = 0x4, offset = 0x4, fixed_abs, tag = 'smem constant byte address 0x4 - core index']
  #allocation1 [shape = 'u32[72,128]{1,0:T(1,128)}', space=vmem, size = 0x9000, scoped, tag = 'internal scratch']
  %s0 = inlined_call_operand.hbm [shape: f32[16,16], index: 0, kind: input, shape index: {}]
  %s1 = inlined_call_operand.hbm [shape: bf16[16,128], index: 1, kind: input, shape index: {}]
  %s2 = inlined_call_operand.vmem [shape: f32[1,128], index: 2, kind: input, shape index: {}]
  %s3 = inlined_call_operand.hbm [shape: bf16[128,128], index: 3, kind: input, shape index: {}]
  %s4 = inlined_call_operand.vmem [shape: f32[1,128], index: 4, kind: input, shape index: {}]
  %s5 = inlined_call_operand.hbm [shape: bf16[128,128], index: 5, kind: input, shape index: {}]
  %s6 = inlined_call_operand.vmem [shape: f32[1,128], index: 6, kind: input, shape index: {}]
  %s7 = inlined_call_operand.hbm [shape: f32[8,16], index: 7, kind: output, shape index: {}]
  %s8 = sld [smem:[#allocation0]]
  $region54: #{tpu_custom_call.1} parent=0
    _
  %s10 = ssub.s32 1, %s8
  %s11 = scalar_select 0, %s10, %s8
  $region1: #{tpu_custom_call.1} parent=0
    #allocation2 [shape = 'u8[8192]{0}', space=vmem, size = 0x2000, scoped, tag = 'input window, operand 0, single buffered']
    #allocation3 [shape = 's32[1]{0}', space=sflag, size = 0x4, scoped, tag = 'scoped memory for tpu_custom_call.1']
    #allocation4 [shape = 's32[1]{0}', space=sflag, size = 0x4, scoped, tag = 'scoped memory for tpu_custom_call.1']
    #allocation5 [shape = 'u8[4096]{0}', space=vmem, size = 0x1000, scoped, tag = 'input window, operand 1, single buffered']
    #allocation6 [shape = 's32[1]{0}', space=sflag, size = 0x4, scoped, tag = 'scoped memory for tpu_custom_call.1']
    #allocation7 [shape = 'u8[32768]{0}', space=vmem, size = 0x8000, scoped, tag = 'input window, operand 3, single buffered']
    #allocation8 [shape = 'u8[32768]{0}', space=vmem, size = 0x8000, scoped, tag = 'input window, operand 5, single buffered']
    #allocation9 [shape = 's32[1]{0}', space=sflag, size = 0x4, scoped, tag = 'scoped memory for tpu_custom_call.1']
    #allocation10 [shape = 'u8[4096]{0}', space=vmem, size = 0x1000, scoped, tag = 'output window, operand 0, single buffered']
    %12 = vsyncpa [#allocation3], 0
    %13 = vsyncpa [#allocation6], 0
    %14 = vsyncpa [#allocation9], 0
    %15 = vsyncpa [#allocation4], 0
    // Predicated region
    $region2: #{tpu_custom_call.1} parent=1 // pred_check
      _
    $region3: #{tpu_custom_call.1} parent=1 // pred_check_branch
      %17 = sbr.rel (0) target = $region5
    $region4: #{tpu_custom_call.1} parent=1 // pred_region
      %19 = vsyncadd [#allocation3], 0
      %s20 = sshll.u32 %s0, 4
      %s21 = int_to_ptr.hbm [resolvable:$true] %s20
      %s22 = sshll.u32 [#allocation2], 4
      %s23 = int_to_ptr.vmem [resolvable:$true] %s22
      %28 = dma.hbm_to_vmem [thread:$0]  %s21, 256, %s23, [#allocation3], 128, 128, 8
    $region5: #{tpu_custom_call.1} parent=1 // pred_fallthru
      _
    // Predicated region
    $region6: #{tpu_custom_call.1} parent=1 // pred_check
      _
    $region7: #{tpu_custom_call.1} parent=1 // pred_check_branch
      %30 = sbr.rel (0) target = $region9
    $region8: #{tpu_custom_call.1} parent=1 // pred_region
      %32 = vsyncadd [#allocation6], 0
      %s33 = sshll.u32 %s1, 4
      %s34 = int_to_ptr.hbm [resolvable:$true] %s33
      %s35 = sshll.u32 [#allocation5], 4
      %s36 = int_to_ptr.vmem [resolvable:$true] %s35
      %41 = dma.hbm_to_vmem [thread:$0]  %s34, 128, %s36, [#allocation6], 64, 64, 4
    $region9: #{tpu_custom_call.1} parent=1 // pred_fallthru
      _
    // Predicated region
    $region10: #{tpu_custom_call.1} parent=1 // pred_check
      _
    $region11: #{tpu_custom_call.1} parent=1 // pred_check_branch
      %43 = sbr.rel (0) target = $region13
    $region12: #{tpu_custom_call.1} parent=1 // pred_region
      _
    $region13: #{tpu_custom_call.1} parent=1 // pred_fallthru
      _
    // Predicated region
    $region14: #{tpu_custom_call.1} parent=1 // pred_check
      _
    $region15: #{tpu_custom_call.1} parent=1 // pred_check_branch
      %45 = sbr.rel (0) target = $region17
    $region16: #{tpu_custom_call.1} parent=1 // pred_region
      %47 = vsyncadd [#allocation6], 0
      %s48 = sshll.u32 %s3, 4
      %s49 = int_to_ptr.hbm [resolvable:$true] %s48
      %s50 = sshll.u32 [#allocation7], 4
      %s51 = int_to_ptr.vmem [resolvable:$true] %s50
      %56 = dma.hbm_to_vmem [thread:$0]  %s49, 1024, %s51, [#allocation6], 64, 64, 4
    $region17: #{tpu_custom_call.1} parent=1 // pred_fallthru
      _
    // Predicated region
    $region18: #{tpu_custom_call.1} parent=1 // pred_check
      _
    $region19: #{tpu_custom_call.1} parent=1 // pred_check_branch
      %58 = sbr.rel (0) target = $region21
    $region20: #{tpu_custom_call.1} parent=1 // pred_region
      _
    $region21: #{tpu_custom_call.1} parent=1 // pred_fallthru
      _
    // Predicated region
    $region22: #{tpu_custom_call.1} parent=1 // pred_check
      _
    $region23: #{tpu_custom_call.1} parent=1 // pred_check_branch
      %60 = sbr.rel (0) target = $region25
    $region24: #{tpu_custom_call.1} parent=1 // pred_region
      %62 = vsyncadd [#allocation9], 0
      %s63 = sshll.u32 %s5, 4
      %s64 = int_to_ptr.hbm [resolvable:$true] %s63
      %s65 = sshll.u32 [#allocation8], 4
      %s66 = int_to_ptr.vmem [resolvable:$true] %s65
      %71 = dma.hbm_to_vmem [thread:$0]  %s64, 1024, %s66, [#allocation9], 64, 64, 4
    $region25: #{tpu_custom_call.1} parent=1 // pred_fallthru
      _
    // Predicated region
    $region26: #{tpu_custom_call.1} parent=1 // pred_check
      _
    $region27: #{tpu_custom_call.1} parent=1 // pred_check_branch
      %73 = sbr.rel (0) target = $region29
    $region28: #{tpu_custom_call.1} parent=1 // pred_region
      _
    $region29: #{tpu_custom_call.1} parent=1 // pred_fallthru
      _
    // Predicated region
    $region30: #{tpu_custom_call.1} parent=1 // pred_check
      _
    $region31: #{tpu_custom_call.1} parent=1 // pred_check_branch
      %75 = sbr.rel (0) target = $region33
    $region32: #{tpu_custom_call.1} parent=1 // pred_region
      %77 = dma.done [#allocation3], 256
    $region33: #{tpu_custom_call.1} parent=1 // pred_fallthru
      _
    // Predicated region
    $region34: #{tpu_custom_call.1} parent=1 // pred_check
      _
    $region35: #{tpu_custom_call.1} parent=1 // pred_check_branch
      %79 = sbr.rel (0) target = $region37
    $region36: #{tpu_custom_call.1} parent=1 // pred_region
      %81 = dma.done [#allocation6], 128
    $region37: #{tpu_custom_call.1} parent=1 // pred_fallthru
      _
    // Predicated region
    $region38: #{tpu_custom_call.1} parent=1 // pred_check
      _
    $region39: #{tpu_custom_call.1} parent=1 // pred_check_branch
      %83 = sbr.rel (0) target = $region41
    $region40: #{tpu_custom_call.1} parent=1 // pred_region
      %85 = dma.done [#allocation6], 1024
    $region41: #{tpu_custom_call.1} parent=1 // pred_fallthru
      _
    // Predicated region
    $region42: #{tpu_custom_call.1} parent=1 // pred_check
      _
    $region43: #{tpu_custom_call.1} parent=1 // pred_check_branch
      %87 = sbr.rel (0) target = $region45
    $region44: #{tpu_custom_call.1} parent=1 // pred_region
      %89 = dma.done [#allocation9], 1024
    $region45: #{tpu_custom_call.1} parent=1 // pred_fallthru
      _
    %v91 = vld [vmem:[#allocation2] sm:$0xff]
    %v92 = vld [vmem:[#allocation2 + $0x8] sm:$0xff]
    %v93 = vpack.c.bf16 %v92, %v91
    %v94 = vld [vmem:[#allocation5] sm:$0xf]
    %v95 = vld [vmem:[#allocation5 + $0x4] sm:$0xf]
    %v96 = vld [vmem:[%s2] sm:$0x1]
    %v98 = vperm.slane %v96, 0
    %v102 = vunpack.c.l.b16 %v94
    %v103 = vunpack.c.l.b16 %v95
    %v104 = vpack.c.b16 %v103, %v102
    %vm106 = vcmask 130048
    %v108 = vsel %vm106, %v93, 0
    %110 = vmatpush.bf16.msra.mxu0 0
    %111 = vmatpush.bf16.msra.mxu0 0
    %112 = vmatpush.bf16.msra.mxu0 0
    %113 = vmatpush.bf16.msra.mxu0 0
    %114 = vmatpush.bf16.msra.mxu0 0
    %115 = vmatpush.bf16.msra.mxu0 0
    %116 = vmatpush.bf16.msra.mxu0 0
    %117 = vmatpush.bf16.msra.mxu0 %v104
    %118 = vmatmul.bf16.gmra.mxu0 %v108
    %v119 = vpop.f32.mrf.mxu0
    %v120 = vadd.f32 %v98, %v119
    %v121 = vpop.f32.mrf.mxu0
    %v122 = vadd.f32 %v98, %v121
    %123 = vdwg.mxu0
    %v124 = vxor.u32 %v120, 2147483648
    %v125 = vxor.u32 %v122, 2147483648
    %v126 = vmul.f32 %v124, 1.442695
    %v127 = vpow.pop %v126
    %v128 = vmul.f32 %v125, 1.442695
    %v129 = vpow.pop %v128
    %v130 = vadd.f32 %v127, 1.0
    %v131 = vadd.f32 %v129, 1.0
    %v132 = vrcp.pop %v130
    %v133 = vmul.f32 %v130, %v132
    %v134 = vsub.f32 1.0, %v133
    %v135 = vmul.f32 %v132, %v134
    %v136 = vadd.f32 %v132, %v135
    %vm137 = vweird.f32 %v130
    %vm138 = vweird.f32 %v132
    %vm139 = vmor %vm137, %vm138
    %v140 = vsel %vm139, %v132, %v136
    %v141 = vand.u32 2147483647, %v130
    %vm142 = vcmp.eq.f32.partialorder %v141, 8.507059e+37
    %v143 = vand.u32 %v130, 2147483648
    %v144 = vor.u32 1.1754944e-38, %v143
    %v145 = vsel %vm142, %v144, %v140
    %v146 = vmul.f32 1.0, %v145
    %v147 = vrcp.pop %v131
    %v148 = vmul.f32 %v131, %v147
    %v149 = vsub.f32 1.0, %v148
    %v150 = vmul.f32 %v147, %v149
    %v151 = vadd.f32 %v147, %v150
    %vm152 = vweird.f32 %v131
    %vm153 = vweird.f32 %v147
    %vm154 = vmor %vm152, %vm153
    %v155 = vsel %vm154, %v147, %v151
    %v156 = vand.u32 2147483647, %v131
    %vm157 = vcmp.eq.f32.partialorder %v156, 8.507059e+37
    %v158 = vand.u32 %v131, 2147483648
    %v159 = vor.u32 1.1754944e-38, %v158
    %v160 = vsel %vm157, %v159, %v155
    %v161 = vmul.f32 1.0, %v160
    %v162 = vpack.c.bf16 %v161, %v146
    %v163 = vld [vmem:[#allocation7] sm:$0xf]
    %v164 = vld [vmem:[#allocation7 + $0x4] sm:$0xf]
    %v165 = vld [vmem:[#allocation7 + $0x8] sm:$0xf]
    %v166 = vld [vmem:[#allocation7 + $0xc] sm:$0xf]
    %v167 = vld [vmem:[#allocation7 + $0x10] sm:$0xf]
    %v168 = vld [vmem:[#allocation7 + $0x14] sm:$0xf]
    %v169 = vld [vmem:[#allocation7 + $0x18] sm:$0xf]
    %v170 = vld [vmem:[#allocation7 + $0x1c] sm:$0xf]
    %v171 = vld [vmem:[#allocation7 + $0x20] sm:$0xf]
    %v172 = vld [vmem:[#allocation7 + $0x24] sm:$0xf]
    %v173 = vld [vmem:[#allocation7 + $0x28] sm:$0xf]
    %v174 = vld [vmem:[#allocation7 + $0x2c] sm:$0xf]
    %v175 = vld [vmem:[#allocation7 + $0x30] sm:$0xf]
    %v176 = vld [vmem:[#allocation7 + $0x34] sm:$0xf]
    %v177 = vld [vmem:[#allocation7 + $0x38] sm:$0xf]
    %v178 = vld [vmem:[#allocation7 + $0x3c] sm:$0xf]
    %v179 = vld [vmem:[%s4] sm:$0x1]
    %v181 = vperm.slane %v179, 0
    %v199 = vunpack.c.l.b16 %v163
    %v200 = vunpack.c.l.b16 %v164
    %v201 = vunpack.c.l.b16 %v165
    %v202 = vunpack.c.l.b16 %v166
    %v203 = vunpack.c.l.b16 %v167
    %v204 = vunpack.c.l.b16 %v168
    %v205 = vunpack.c.l.b16 %v169
    %v206 = vunpack.c.l.b16 %v170
    %v207 = vunpack.c.l.b16 %v171
    %v208 = vunpack.c.l.b16 %v172
    %v209 = vunpack.c.l.b16 %v173
    %v210 = vunpack.c.l.b16 %v174
    %v211 = vunpack.c.l.b16 %v175
    %v212 = vunpack.c.l.b16 %v176
    %v213 = vunpack.c.l.b16 %v177
    %v214 = vunpack.c.l.b16 %v178
    %v215 = vpack.c.b16 %v200, %v199
    %v216 = vpack.c.b16 %v202, %v201
    %v217 = vpack.c.b16 %v204, %v203
    %v218 = vpack.c.b16 %v206, %v205
    %v219 = vpack.c.b16 %v208, %v207
    %v220 = vpack.c.b16 %v210, %v209
    %v221 = vpack.c.b16 %v212, %v211
    %v222 = vpack.c.b16 %v214, %v213
    %231 = vmatpush.bf16.msra.mxu0 %v222
    %232 = vmatpush.bf16.msra.mxu0 %v221
    %233 = vmatpush.bf16.msra.mxu0 %v220
    %234 = vmatpush.bf16.msra.mxu0 %v219
    %235 = vmatpush.bf16.msra.mxu0 %v218
    %236 = vmatpush.bf16.msra.mxu0 %v217
    %237 = vmatpush.bf16.msra.mxu0 %v216
    %238 = vmatpush.bf16.msra.mxu0 %v215
    %239 = vmatmul.bf16.gmra.mxu0 %v162
    %v240 = vpop.f32.mrf.mxu0
    %v241 = vadd.f32 %v181, %v240
    %v242 = vpop.f32.mrf.mxu0
    %v243 = vadd.f32 %v181, %v242
    %244 = vdwg.mxu0
    %v245 = vxor.u32 %v241, 2147483648
    %v246 = vxor.u32 %v243, 2147483648
    %v247 = vmul.f32 %v245, 1.442695
    %v248 = vpow.pop %v247
    %v249 = vmul.f32 %v246, 1.442695
    %v250 = vpow.pop %v249
    %v251 = vadd.f32 %v248, 1.0
    %v252 = vadd.f32 %v250, 1.0
    %v253 = vrcp.pop %v251
    %v254 = vmul.f32 %v251, %v253
    %v255 = vsub.f32 1.0, %v254
    %v256 = vmul.f32 %v253, %v255
    %v257 = vadd.f32 %v253, %v256
    %vm258 = vweird.f32 %v251
    %vm259 = vweird.f32 %v253
    %vm260 = vmor %vm258, %vm259
    %v261 = vsel %vm260, %v253, %v257
    %v262 = vand.u32 2147483647, %v251
    %vm263 = vcmp.eq.f32.partialorder %v262, 8.507059e+37
    %v264 = vand.u32 %v251, 2147483648
    %v265 = vor.u32 1.1754944e-38, %v264
    %v266 = vsel %vm263, %v265, %v261
    %v267 = vmul.f32 1.0, %v266
    %v268 = vrcp.pop %v252
    %v269 = vmul.f32 %v252, %v268
    %v270 = vsub.f32 1.0, %v269
    %v271 = vmul.f32 %v268, %v270
    %v272 = vadd.f32 %v268, %v271
    %vm273 = vweird.f32 %v252
    %vm274 = vweird.f32 %v268
    %vm275 = vmor %vm273, %vm274
    %v276 = vsel %vm275, %v268, %v272
    %v277 = vand.u32 2147483647, %v252
    %vm278 = vcmp.eq.f32.partialorder %v277, 8.507059e+37
    %v279 = vand.u32 %v252, 2147483648
    %v280 = vor.u32 1.1754944e-38, %v279
    %v281 = vsel %vm278, %v280, %v276
    %v282 = vmul.f32 1.0, %v281
    %v283 = vpack.c.bf16 %v282, %v267
    %v284 = vld [vmem:[#allocation8] sm:$0xf]
    %v285 = vld [vmem:[#allocation8 + $0x4] sm:$0xf]
    %v286 = vld [vmem:[#allocation8 + $0x8] sm:$0xf]
    %v287 = vld [vmem:[#allocation8 + $0xc] sm:$0xf]
    %v288 = vld [vmem:[#allocation8 + $0x10] sm:$0xf]
    %v289 = vld [vmem:[#allocation8 + $0x14] sm:$0xf]
    %v290 = vld [vmem:[#allocation8 + $0x18] sm:$0xf]
    %v291 = vld [vmem:[#allocation8 + $0x1c] sm:$0xf]
    %v292 = vld [vmem:[#allocation8 + $0x20] sm:$0xf]
    %v293 = vld [vmem:[#allocation8 + $0x24] sm:$0xf]
    %v294 = vld [vmem:[#allocation8 + $0x28] sm:$0xf]
    %v295 = vld [vmem:[#allocation8 + $0x2c] sm:$0xf]
    %v296 = vld [vmem:[#allocation8 + $0x30] sm:$0xf]
    %v297 = vld [vmem:[#allocation8 + $0x34] sm:$0xf]
    %v298 = vld [vmem:[#allocation8 + $0x38] sm:$0xf]
    %v299 = vld [vmem:[#allocation8 + $0x3c] sm:$0xf]
    %v300 = vld [vmem:[%s6] sm:$0x1]
    %v302 = vperm.slane %v300, 0
    %v320 = vunpack.c.l.b16 %v284
    %v321 = vunpack.c.l.b16 %v285
    %v322 = vunpack.c.l.b16 %v286
    %v323 = vunpack.c.l.b16 %v287
    %v324 = vunpack.c.l.b16 %v288
    %v325 = vunpack.c.l.b16 %v289
    %v326 = vunpack.c.l.b16 %v290
    %v327 = vunpack.c.l.b16 %v291
    %v328 = vunpack.c.l.b16 %v292
    %v329 = vunpack.c.l.b16 %v293
    %v330 = vunpack.c.l.b16 %v294
    %v331 = vunpack.c.l.b16 %v295
    %v332 = vunpack.c.l.b16 %v296
    %v333 = vunpack.c.l.b16 %v297
    %v334 = vunpack.c.l.b16 %v298
    %v335 = vunpack.c.l.b16 %v299
    %v336 = vpack.c.b16 %v321, %v320
    %v337 = vpack.c.b16 %v323, %v322
    %v338 = vpack.c.b16 %v325, %v324
    %v339 = vpack.c.b16 %v327, %v326
    %v340 = vpack.c.b16 %v329, %v328
    %v341 = vpack.c.b16 %v331, %v330
    %v342 = vpack.c.b16 %v333, %v332
    %v343 = vpack.c.b16 %v335, %v334
    %352 = vmatpush.bf16.msra.mxu0 %v343
    %353 = vmatpush.bf16.msra.mxu0 %v342
    %354 = vmatpush.bf16.msra.mxu0 %v341
    %355 = vmatpush.bf16.msra.mxu0 %v340
    %356 = vmatpush.bf16.msra.mxu0 %v339
    %357 = vmatpush.bf16.msra.mxu0 %v338
    %358 = vmatpush.bf16.msra.mxu0 %v337
    %359 = vmatpush.bf16.msra.mxu0 %v336
    %360 = vmatmul.bf16.gmra.mxu0 %v283
    %v361 = vpop.f32.mrf.mxu0
    %v362 = vadd.f32 %v302, %v361
    %v363 = vpop.f32.mrf.mxu0
    %v364 = vadd.f32 %v302, %v363
    %365 = vdwg.mxu0
    %v366 = vxor.u32 %v362, 2147483648
    %v367 = vxor.u32 %v364, 2147483648
    %v368 = vmul.f32 %v366, 1.442695
    %v369 = vpow.pop %v368
    %v370 = vmul.f32 %v367, 1.442695
    %v371 = vpow.pop %v370
    %v372 = vadd.f32 %v369, 1.0
    %v373 = vadd.f32 %v371, 1.0
    %v374 = vrcp.pop %v372
    %v375 = vmul.f32 %v372, %v374
    %v376 = vsub.f32 1.0, %v375
    %v377 = vmul.f32 %v374, %v376
    %v378 = vadd.f32 %v374, %v377
    %vm379 = vweird.f32 %v372
    %vm380 = vweird.f32 %v374
    %vm381 = vmor %vm379, %vm380
    %v382 = vsel %vm381, %v374, %v378
    %v383 = vand.u32 2147483647, %v372
    %vm384 = vcmp.eq.f32.partialorder %v383, 8.507059e+37
    %v385 = vand.u32 %v372, 2147483648
    %v386 = vor.u32 1.1754944e-38, %v385
    %v387 = vsel %vm384, %v386, %v382
    %v388 = vmul.f32 1.0, %v387
    %v389 = vrcp.pop %v373
    %v390 = vmul.f32 %v373, %v389
    %v391 = vsub.f32 1.0, %v390
    %v392 = vmul.f32 %v389, %v391
    %v393 = vadd.f32 %v389, %v392
    %vm394 = vweird.f32 %v373
    %vm395 = vweird.f32 %v389
    %vm396 = vmor %vm394, %vm395
    %v397 = vsel %vm396, %v389, %v393
    %v398 = vand.u32 2147483647, %v373
    %vm399 = vcmp.eq.f32.partialorder %v398, 8.507059e+37
    %v400 = vand.u32 %v373, 2147483648
    %v401 = vor.u32 1.1754944e-38, %v400
    %v402 = vsel %vm399, %v401, %v397
    %v403 = vmul.f32 1.0, %v402
    %404 = vxpose.xlu0.b32.start [1/16] %v388, 128
    %405 = vxpose.xlu0.b32.cont [2/16] %v403, 128
    %406 = vxpose.xlu0.b32.cont [3/16] 0.0, 128
    %407 = vxpose.xlu0.b32.cont [4/16] 0.0, 128
    %408 = vxpose.xlu0.b32.cont [5/16] 0.0, 128
    %409 = vxpose.xlu0.b32.cont [6/16] 0.0, 128
    %410 = vxpose.xlu0.b32.cont [7/16] 0.0, 128
    %411 = vxpose.xlu0.b32.cont [8/16] 0.0, 128
    %412 = vxpose.xlu0.b32.cont [9/16] 0.0, 128
    %413 = vxpose.xlu0.b32.cont [10/16] 0.0, 128
    %414 = vxpose.xlu0.b32.cont [11/16] 0.0, 128
    %415 = vxpose.xlu0.b32.cont [12/16] 0.0, 128
    %416 = vxpose.xlu0.b32.cont [13/16] 0.0, 128
    %417 = vxpose.xlu0.b32.cont [14/16] 0.0, 128
    %418 = vxpose.xlu0.b32.cont [15/16] 0.0, 128
    %419 = vxpose.xlu0.b32.end [16/16] 0.0, 128
    %v420 = vpop.trf.xlu0
    %v421 = vpop.trf.xlu0
    %v422 = vpop.trf.xlu0
    %v423 = vpop.trf.xlu0
    %v424 = vpop.trf.xlu0
    %v425 = vpop.trf.xlu0
    %v426 = vpop.trf.xlu0
    %v427 = vpop.trf.xlu0
    %v428 = vpop.trf.xlu0
    %v429 = vpop.trf.xlu0
    %v430 = vpop.trf.xlu0
    %v431 = vpop.trf.xlu0
    %v432 = vpop.trf.xlu0
    %v433 = vpop.trf.xlu0
    %v434 = vpop.trf.xlu0
    %v435 = vpop.trf.xlu0
    %436 = vst.msk [vmem:[#allocation10] sm:$0xff] %vm106, %v420
    // Predicated region
    $region46: #{tpu_custom_call.1} parent=1 // pred_check
      _
    $region47: #{tpu_custom_call.1} parent=1 // pred_check_branch
      %438 = sbr.rel (0) target = $region49
    $region48: #{tpu_custom_call.1} parent=1 // pred_region
      %440 = vsyncadd [#allocation4], 0
      %s442 = sshll.u32 [#allocation10], 4
      %s443 = int_to_ptr.vmem [resolvable:$true] %s442
      %s444 = sshll.u32 %s7, 4
      %s445 = int_to_ptr.hbm [resolvable:$true] %s444
      %447 = dma.vmem_to_hbm [thread:$0]  %s443, 128, %s445, [#allocation4]
    $region49: #{tpu_custom_call.1} parent=1 // pred_fallthru
      _
    // Predicated region
    $region50: #{tpu_custom_call.1} parent=1 // pred_check
      _
    $region51: #{tpu_custom_call.1} parent=1 // pred_check_branch
      %449 = sbr.rel (0) target = $region53
    $region52: #{tpu_custom_call.1} parent=1 // pred_region
      %451 = dma.done [#allocation4], 128
    $region53: #{tpu_custom_call.1} parent=1 // pred_fallthru
      _
    %452 = vsyncpa [#allocation3], 1
    %453 = vsyncpa [#allocation6], 1
    %454 = vsyncpa [#allocation9], 1
    %455 = vsyncpa [#allocation4], 1

</llo_original>
